<compile_context>
chip_gen: v7x
topology: tpu7x:2x2x1
jax: 0.10.0
libtpu: 0.0.40
codegen_flags: <defaults>
</compile_context>

<pallas_src>
import math
from functools import partial

import jax
import jax.numpy as jnp
from jax.experimental import pallas as pl
from jax.experimental.pallas import tpu as pltpu


# ---------------------------------------------------------------------------
# Fused Pallas kernel: temporal conv (kt=3) + bias + align + activation,
# B_TILE batch samples per grid step.
# ---------------------------------------------------------------------------
def _make_tcn_kernel(v, m_pad, c_in, c_out, c_conv, act, b_tile):
    """In-kernel layout: (B_TILE, channels[sublanes], M_pad[lanes])."""

    def kernel(x_ref, w_ref, o_ref, xs_ref):
        x0 = x_ref[...]                                     # (B, c_in, M_pad)

        # Build X_stack = [x(t-1); x(t); x(t+1); 1] directly in VMEM scratch.
        # lane l = t*V + node; "same" temporal padding -> zero edge columns.
        # Lanes >= M (the 128-alignment pad) are zero in x0, so the t+1 tap's
        # last valid timestep automatically sees zeros there as well.
        zed = jnp.zeros((b_tile, c_in, v), x0.dtype)
        xs_ref[:, 0 * c_in:1 * c_in, :v] = zed                          # t = 0 edge
        xs_ref[:, 0 * c_in:1 * c_in, v:] = x0[:, :, :m_pad - v]         # x(t-1)
        xs_ref[:, 1 * c_in:2 * c_in, :] = x0                            # x(t)
        xs_ref[:, 2 * c_in:3 * c_in, :m_pad - v] = x0[:, :, v:]         # x(t+1)
        xs_ref[:, 2 * c_in:3 * c_in, m_pad - v:] = zed                  # t = T-1 edge
        xs_ref[:, 3 * c_in:3 * c_in + 1, :] = jnp.ones((b_tile, 1, m_pad),
                                                       x0.dtype)        # bias row

        # Single fused (batched) matmul on the MXU, f32 accumulation:
        #   rows [0, c_conv)            -> temporal conv + its bias
        #   rows [c_conv, c_conv+c_out) -> align path (1x1 conv / pad / id) + bias
        dn = (((2,), (1,)), ((0,), (0,)))                   # contract K, batch B
        res = jax.lax.dot_general(w_ref[...], xs_ref[...], dn,
                                  preferred_element_type=jnp.float32)
        conv = res[:, :c_conv, :]                           # (B, c_conv, M_pad)
        x_in = res[:, c_conv:, :]                           # (B, c_out,  M_pad)

        if act == 'GLU':
            h = (conv[:, :c_out, :] + x_in) * jax.nn.sigmoid(conv[:, c_out:, :])
        elif act == 'sigmoid':
            h = jax.nn.sigmoid(conv + x_in)
        else:
            h = conv + x_in

        # TODO(synk): training-mode dropout (inverted-dropout mask via the
        # pltpu PRNG) is not implemented; this is the eval-mode forward.
        o_ref[...] = h.astype(o_ref.dtype)

    return kernel


@partial(jax.jit, static_argnames=("c_out", "c_conv", "act", "batch_tile"))
def tcn_forward_pallas(x, w_fused, *, c_out, c_conv, act, batch_tile=8):
    """x: (N, c_in, T, V) f32; w_fused: (c_conv + c_out, 3*c_in + 1) f32."""
    n, c_in, t, v = x.shape
    m = t * v
    m_pad = pl.cdiv(m, 128) * 128                # lane-dense (unmasked vst)

    x_flat = x.reshape(n, c_in, m)               # free: collapses minor dims
    if m_pad != m:
        x_flat = jnp.pad(x_flat, ((0, 0), (0, 0), (0, m_pad - m)))

    # Several samples per grid step (amortize the ~600-cycle step overhead),
    # but keep >= 2 steps when possible so v7x's two TensorCores both work.
    b_tile = max(1, min(batch_tile, pl.cdiv(n, 2)))
    n_pad = pl.cdiv(n, b_tile) * b_tile
    if n_pad != n:
        x_flat = jnp.pad(x_flat, ((0, n_pad - n), (0, 0), (0, 0)))

    r_out, k_tot = w_fused.shape
    w_tiled = jnp.broadcast_to(w_fused, (b_tile, r_out, k_tot))   # tiny

    kernel = _make_tcn_kernel(v, m_pad, c_in, c_out, c_conv, act, b_tile)

    flops = 2 * n_pad * r_out * k_tot * m_pad
    transcendentals = n_pad * c_out * m_pad if act in ('GLU', 'sigmoid') else 0
    bytes_accessed = 4 * (n_pad * c_in * m_pad + n_pad * c_out * m_pad
                          + b_tile * r_out * k_tot)

    y = pl.pallas_call(
        kernel,
        out_shape=jax.ShapeDtypeStruct((n_pad, c_out, m_pad), x.dtype),
        grid=(n_pad // b_tile,),
        in_specs=[
            pl.BlockSpec((b_tile, c_in, m_pad), lambda i: (i, 0, 0)),
            pl.BlockSpec((b_tile, r_out, k_tot), lambda i: (0, 0, 0)),
        ],
        out_specs=pl.BlockSpec((b_tile, c_out, m_pad), lambda i: (i, 0, 0)),
        scratch_shapes=[pltpu.VMEM((b_tile, k_tot, m_pad), x.dtype)],
        compiler_params=pltpu.CompilerParams(
            dimension_semantics=("parallel",)),
        cost_estimate=pl.CostEstimate(flops=int(flops),
                                      transcendentals=int(transcendentals),
                                      bytes_accessed=int(bytes_accessed)),
    )(x_flat, w_tiled)

    return y[:n, :, :m].reshape(n, c_out, t, v)


# ---------------------------------------------------------------------------
# Module wrapper (parameter init mimics nn.Conv2d defaults, deterministic).
# ---------------------------------------------------------------------------
class TCNLayer:
    """JAX/Pallas port of tcn_layer (forward pass, eval mode)."""

    def __init__(self, kt, c_in, c_out, act='linear', dropout=0.1, *, key):
        if kt != 3:
            raise ValueError("padding=(1,0) with a residual add requires kt == 3")
        self.kt, self.c_in, self.c_out = kt, c_in, c_out
        self.act, self.dropout = act, dropout
        self.c_conv = 2 * c_out if act == 'GLU' else c_out

        k1, k2, k3, k4 = jax.random.split(key, 4)

        # nn.Conv2d(c_in, c_conv, (kt, 1), padding=(1, 0)) default init.
        bound = 1.0 / math.sqrt(c_in * kt)
        w = jax.random.uniform(k1, (self.c_conv, c_in, kt, 1), jnp.float32,
                               -bound, bound)
        self.w_conv = jnp.transpose(w[:, :, :, 0], (2, 0, 1))   # (kt, c_conv, c_in)
        self.b_conv = jax.random.uniform(k2, (self.c_conv,), jnp.float32,
                                         -bound, bound)

        if c_in > c_out:      # align = nn.Conv2d(c_in, c_out, 1)
            self.align_mode = 'conv'
            ab = 1.0 / math.sqrt(c_in)
            wa = jax.random.uniform(k3, (c_out, c_in, 1, 1), jnp.float32, -ab, ab)
            self.w_align = wa[:, :, 0, 0]                        # (c_out, c_in)
            self.b_align = jax.random.uniform(k4, (c_out,), jnp.float32, -ab, ab)
        else:
            self.align_mode = 'pad' if c_in < c_out else 'id'
            self.w_align = None
            self.b_align = None

        # Fused weight: one matmul computes the temporal conv (+bias) AND the
        # align/residual path (+bias). Columns: [x(t-1) | x(t) | x(t+1) | 1].
        k_tot = kt * c_in + 1
        r_out = self.c_conv + c_out
        wf = jnp.zeros((r_out, k_tot), jnp.float32)
        for d in range(kt):
            wf = wf.at[:self.c_conv, d * c_in:(d + 1) * c_in].set(self.w_conv[d])
        wf = wf.at[:self.c_conv, k_tot - 1].set(self.b_conv)
        if self.align_mode == 'conv':
            wf = wf.at[self.c_conv:, c_in:2 * c_in].set(self.w_align)
            wf = wf.at[self.c_conv:, k_tot - 1].set(self.b_align)
        else:
            # identity / channel zero-pad are both a rectangular identity.
            wf = wf.at[self.c_conv:, c_in:2 * c_in].set(
                jnp.eye(c_out, c_in, dtype=jnp.float32))
        self.w_fused = wf

    def __call__(self, x):
        assert x.shape[1] == self.c_in
        return tcn_forward_pallas(x, self.w_fused, c_out=self.c_out,
                                  c_conv=self.c_conv, act=self.act)


# ---------------------------------------------------------------------------
# Pure-JAX reference for correctness checking.
# ---------------------------------------------------------------------------
def _ref_tcn(x, mod: TCNLayer):
    n, c, t, v = x.shape
    xp = jnp.pad(x, ((0, 0), (0, 0), (1, 1), (0, 0)))
    conv = sum(jnp.einsum('oc,nctv->notv', mod.w_conv[d], xp[:, :, d:d + t, :])
               for d in range(mod.kt))
    conv = conv + mod.b_conv[None, :, None, None]
    if mod.align_mode == 'conv':
        x_in = (jnp.einsum('oc,nctv->notv', mod.w_align, x)
                + mod.b_align[None, :, None, None])
    elif mod.align_mode == 'pad':
        x_in = jnp.pad(x, ((0, 0), (0, mod.c_out - mod.c_in), (0, 0), (0, 0)))
    else:
        x_in = x
    if mod.act == 'GLU':
        return (conv[:, :mod.c_out] + x_in) * jax.nn.sigmoid(conv[:, mod.c_out:])
    if mod.act == 'sigmoid':
        return jax.nn.sigmoid(conv + x_in)
    return conv + x_in


# ---------------------------------------------------------------------------
if __name__ == "__main__":
    key = jax.random.PRNGKey(0)
    kx1, kx2, kx4, k1, k2, k3, k4 = jax.random.split(key, 7)

    N, T, V, KT = 8, 16, 16, 3     # M = T*V = 256 -> lane-dense tiles, grid = 2

    # Case 1: GLU activation, c_in < c_out (channel-pad align).
    x1 = jax.random.normal(kx1, (N, 4, T, V), jnp.float32)
    m1 = TCNLayer(KT, 4, 8, act='GLU', key=k1)
    y1 = jax.block_until_ready(m1(x1))
    r1 = _ref_tcn(x1, m1)
    assert y1.shape == (N, 8, T, V)
    err1 = float(jnp.max(jnp.abs(y1 - r1)))
    assert err1 < 1e-3, f"GLU mismatch: {err1}"

    # Case 2: sigmoid activation, c_in > c_out (1x1-conv align).
    x2 = jax.random.normal(kx2, (N, 8, T, V), jnp.float32)
    m2 = TCNLayer(KT, 8, 4, act='sigmoid', key=k2)
    y2 = jax.block_until_ready(m2(x2))
    r2 = _ref_tcn(x2, m2)
    assert y2.shape == (N, 4, T, V)
    err2 = float(jnp.max(jnp.abs(y2 - r2)))
    assert err2 < 1e-3, f"sigmoid mismatch: {err2}"

    # Case 3: linear activation, c_in == c_out (identity align).
    m3 = TCNLayer(KT, 4, 4, act='linear', key=k3)
    y3 = jax.block_until_ready(m3(x1))
    r3 = _ref_tcn(x1, m3)
    assert y3.shape == (N, 4, T, V)
    err3 = float(jnp.max(jnp.abs(y3 - r3)))
    assert err3 < 1e-3, f"linear mismatch: {err3}"

    # Case 4: ragged spatial size (skeleton-like V=25 -> M=200, padded to 256).
    x4 = jax.random.normal(kx4, (4, 4, 8, 25), jnp.float32)
    m4 = TCNLayer(KT, 4, 8, act='GLU', key=k4)
    y4 = jax.block_until_ready(m4(x4))
    r4 = _ref_tcn(x4, m4)
    assert y4.shape == (4, 8, 8, 25)
    err4 = float(jnp.max(jnp.abs(y4 - r4)))
    assert err4 < 1e-3, f"ragged-M mismatch: {err4}"

    print("KERNEL_OK")
</pallas_src>

<mosaic_0001>
module attributes {stable_mosaic.version = 11 : i64} {
  func.func @kernel(%arg0: i32, %arg1: memref<4x4x256xf32, #tpu.memory_space<vmem>>, %arg2: memref<4x24x13xf32, #tpu.memory_space<vmem>>, %arg3: memref<4x8x256xf32, #tpu.memory_space<vmem>>, %arg4: memref<4x13x256xf32, #tpu.memory_space<vmem>>) attributes {dimension_semantics = [#tpu.dimension_semantics<parallel>], iteration_bounds = array<i64: 2>, scalar_prefetch = 0 : i64, scratch_operands = 1 : i64, tpu.core_type = #tpu.core_type<tc>, window_params = [{transform_indices = @transform_0, window_bounds = array<i64: 4, 4, 256>}, {pipeline_mode = #tpu.pipeline_mode<synchronous>, transform_indices = @transform_1, window_bounds = array<i64: 4, 24, 13>}, {transform_indices = @transform_2, window_bounds = array<i64: 4, 8, 256>}]} {
    %c0 = arith.constant 0 : index
    %c0_0 = arith.constant 0 : index
    %c0_1 = arith.constant 0 : index
    %0 = vector.load %arg1[%c0, %c0_0, %c0_1] : memref<4x4x256xf32, #tpu.memory_space<vmem>>, vector<4x4x256xf32>
    %cst = arith.constant 0.000000e+00 : f32
    %1 = vector.broadcast %cst : f32 to vector<4x4x16xf32>
    %c0_2 = arith.constant 0 : index
    %c0_3 = arith.constant 0 : index
    %c0_4 = arith.constant 0 : index
    %2 = vector.load %arg4[%c0_2, %c0_3, %c0_4] : memref<4x13x256xf32, #tpu.memory_space<vmem>>, vector<4x4x16xf32>
    tpu.vector_store %arg4[%c0_2, %c0_3, %c0_4], %1 {strides = array<i32>} : memref<4x13x256xf32, #tpu.memory_space<vmem>>, vector<4x4x16xf32>,
    %3 = vector.extract_strided_slice %0 {offsets = [0, 0, 0], sizes = [4, 4, 240], strides = [1, 1, 1]} : vector<4x4x256xf32> to vector<4x4x240xf32>
    %c0_5 = arith.constant 0 : index
    %c0_6 = arith.constant 0 : index
    %c16 = arith.constant 16 : index
    %4 = vector.load %arg4[%c0_5, %c0_6, %c16] : memref<4x13x256xf32, #tpu.memory_space<vmem>>, vector<4x4x240xf32>
    tpu.vector_store %arg4[%c0_5, %c0_6, %c16], %3 {strides = array<i32>} : memref<4x13x256xf32, #tpu.memory_space<vmem>>, vector<4x4x240xf32>,
    %c0_7 = arith.constant 0 : index
    %c4 = arith.constant 4 : index
    %c0_8 = arith.constant 0 : index
    %5 = vector.load %arg4[%c0_7, %c4, %c0_8] : memref<4x13x256xf32, #tpu.memory_space<vmem>>, vector<4x4x256xf32>
    tpu.vector_store %arg4[%c0_7, %c4, %c0_8], %0 {strides = array<i32>} : memref<4x13x256xf32, #tpu.memory_space<vmem>>, vector<4x4x256xf32>,
    %6 = vector.extract_strided_slice %0 {offsets = [0, 0, 16], sizes = [4, 4, 240], strides = [1, 1, 1]} : vector<4x4x256xf32> to vector<4x4x240xf32>
    %c0_9 = arith.constant 0 : index
    %c8 = arith.constant 8 : index
    %c0_10 = arith.constant 0 : index
    %7 = vector.load %arg4[%c0_9, %c8, %c0_10] : memref<4x13x256xf32, #tpu.memory_space<vmem>>, vector<4x4x240xf32>
    tpu.vector_store %arg4[%c0_9, %c8, %c0_10], %6 {strides = array<i32>} : memref<4x13x256xf32, #tpu.memory_space<vmem>>, vector<4x4x240xf32>,
    %c0_11 = arith.constant 0 : index
    %c8_12 = arith.constant 8 : index
    %c240 = arith.constant 240 : index
    %8 = vector.load %arg4[%c0_11, %c8_12, %c240] : memref<4x13x256xf32, #tpu.memory_space<vmem>>, vector<4x4x16xf32>
    tpu.vector_store %arg4[%c0_11, %c8_12, %c240], %1 {strides = array<i32>} : memref<4x13x256xf32, #tpu.memory_space<vmem>>, vector<4x4x16xf32>,
    %cst_13 = arith.constant 1.000000e+00 : f32
    %9 = vector.broadcast %cst_13 : f32 to vector<4x1x256xf32>
    %c0_14 = arith.constant 0 : index
    %c12 = arith.constant 12 : index
    %c0_15 = arith.constant 0 : index
    %10 = vector.load %arg4[%c0_14, %c12, %c0_15] : memref<4x13x256xf32, #tpu.memory_space<vmem>>, vector<4x1x256xf32>
    tpu.vector_store %arg4[%c0_14, %c12, %c0_15], %9 {strides = array<i32>} : memref<4x13x256xf32, #tpu.memory_space<vmem>>, vector<4x1x256xf32>,
    %c0_16 = arith.constant 0 : index
    %c0_17 = arith.constant 0 : index
    %c0_18 = arith.constant 0 : index
    %11 = vector.load %arg2[%c0_16, %c0_17, %c0_18] : memref<4x24x13xf32, #tpu.memory_space<vmem>>, vector<4x24x13xf32>
    %c0_19 = arith.constant 0 : index
    %c0_20 = arith.constant 0 : index
    %c0_21 = arith.constant 0 : index
    %12 = vector.load %arg4[%c0_19, %c0_20, %c0_21] : memref<4x13x256xf32, #tpu.memory_space<vmem>>, vector<4x13x256xf32>
    %cst_22 = arith.constant dense<0.000000e+00> : vector<4x24x256xf32>
    %13 = tpu.matmul %11, %12, %cst_22 {dimension_numbers = #tpu.dot_dimension_numbers<[2], [1], [1], [2], [0, 0, 0, 1, 1, 2], [0], [0]>} : vector<4x24x13xf32>, vector<4x13x256xf32>, vector<4x24x256xf32> -> vector<4x24x256xf32>
    %14 = vector.extract_strided_slice %13 {offsets = [0, 0, 0], sizes = [4, 16, 256], strides = [1, 1, 1]} : vector<4x24x256xf32> to vector<4x16x256xf32>
    %15 = vector.extract_strided_slice %13 {offsets = [0, 16, 0], sizes = [4, 8, 256], strides = [1, 1, 1]} : vector<4x24x256xf32> to vector<4x8x256xf32>
    %16 = vector.extract_strided_slice %14 {offsets = [0, 0, 0], sizes = [4, 8, 256], strides = [1, 1, 1]} : vector<4x16x256xf32> to vector<4x8x256xf32>
    %17 = arith.addf %16, %15 : vector<4x8x256xf32>
    %18 = vector.extract_strided_slice %14 {offsets = [0, 8, 0], sizes = [4, 8, 256], strides = [1, 1, 1]} : vector<4x16x256xf32> to vector<4x8x256xf32>
    %19 = arith.negf %18 : vector<4x8x256xf32>
    %20 = math.exp %19 : vector<4x8x256xf32>
    %cst_23 = arith.constant 1.000000e+00 : f32
    %21 = vector.broadcast %cst_23 : f32 to vector<4x8x256xf32>
    %22 = arith.addf %21, %20 : vector<4x8x256xf32>
    %23 = arith.divf %21, %22 : vector<4x8x256xf32>
    %24 = arith.mulf %17, %23 : vector<4x8x256xf32>
    %c0_24 = arith.constant 0 : index
    %c0_25 = arith.constant 0 : index
    %c0_26 = arith.constant 0 : index
    %25 = vector.load %arg3[%c0_24, %c0_25, %c0_26] : memref<4x8x256xf32, #tpu.memory_space<vmem>>, vector<4x8x256xf32>
    tpu.vector_store %arg3[%c0_24, %c0_25, %c0_26], %24 {strides = array<i32>} : memref<4x8x256xf32, #tpu.memory_space<vmem>>, vector<4x8x256xf32>,
    return
  }
  func.func @transform_0(%arg0: i32) -> (i32, i32, i32) {
    %c0_i32 = arith.constant 0 : i32
    %c0_i32_0 = arith.constant 0 : i32
    %c0_i32_1 = arith.constant 0 : i32
    return %arg0, %c0_i32, %c0_i32_0 : i32, i32, i32
  }
  func.func @transform_1(%arg0: i32) -> (i32, i32, i32) {
    %c0_i32 = arith.constant 0 : i32
    %c0_i32_0 = arith.constant 0 : i32
    %c0_i32_1 = arith.constant 0 : i32
    %c0_i32_2 = arith.constant 0 : i32
    return %c0_i32, %c0_i32_0, %c0_i32_1 : i32, i32, i32
  }
  func.func @transform_2(%arg0: i32) -> (i32, i32, i32) {
    %c0_i32 = arith.constant 0 : i32
    %c0_i32_0 = arith.constant 0 : i32
    %c0_i32_1 = arith.constant 0 : i32
    return %arg0, %c0_i32, %c0_i32_0 : i32, i32, i32
  }
}

</mosaic_0001>

<llo_original>
// kernel: tcn_forward_pallas.1
$region0: #{tcn_forward_pallas.1}
  #allocation0 [shape = 'u32[]', space=smem, size = 0x4, offset = 0x4, fixed_abs, tag = 'smem constant byte address 0x4 - core index']
  #allocation1 [shape = 'u32[144,128]{1,0:T(1,128)}', space=vmem, size = 0x12000, scoped, tag = 'internal scratch']
  #allocation2 [shape = 'f32[4,13,256]{2,1,0:T(8,128)}', space=vmem, size = 0x10000, scoped, tag = 'scratch operand']
  %s0 = inlined_call_operand.vmem [shape: f32[8,4,256], index: 0, kind: input, shape index: {}]
  %s1 = inlined_call_operand.vmem [shape: f32[4,24,13], index: 1, kind: input, shape index: {}]
  %s2 = inlined_call_operand.vmem [shape: f32[8,8,256], index: 2, kind: output, shape index: {}]
  %s3 = sld [smem:[#allocation0]]
  $region41: #{tcn_forward_pallas.1} parent=0
    _
  %s5 = ssub.s32 1, %s3
  %s6 = scalar_select 0, %s5, %s3
  loop: start=0, step=1, limit=4
  $region2: #{tcn_forward_pallas.1} parent=0 // loop_pre_header
    _
  $region3: #{tcn_forward_pallas.1} parent=0 // loop_header
    %s8 = sphi 0, %s12
    %p9 = scmp.ge.s32.totalorder %s8, 4
    %s18 = sphi 0, %s20
    %s21 = sphi 0, %s18
    %s22 = sphi 0, %s21
    %s38 = sphi 0, %s22
    %s42 = sphi 0, %s42
    %s44 = sphi 0, %s42
    %s45 = sphi 0, %s44
    %s59 = sphi 0, %s45
    %s65 = sphi 0, %s67
    %s68 = sphi 0, %s65
    %s69 = sphi 0, %s68
    %s85 = sphi 0, %s69
  $region4: #{tcn_forward_pallas.1} parent=0 // loop_header_branch
    %11 = sbr.rel (%p9) target = $region8
  $region5: #{tcn_forward_pallas.1} parent=0 // loop_body
    %s13 = ssub.s32 %s8, 1
    %s14 = ssub.s32 %s8, 2
    %s15 = sadd.s32 %s8, 1
    %s16 = ssub.s32 %s8, %s15
    %p17 = scmp.eq.s32.totalorder %s16, 0
    %s19 = sadd.s32 %s18, 1
    %s20 = scalar_select %p17, %s18, %s19
    %p23 = pneg %p17
    %p24 = scmp.eq.s32.totalorder %s8, 1
    %p25 = por %p23, %p24
    %p26 = scmp.ne.s32.totalorder %s18, %s21
    %p27 = scmp.eq.s32.totalorder %s8, 0
    %p28 = por %p26, %p27
    %p29 = scmp.ne.s32.totalorder %s18, %s21
    %p30 = scmp.eq.s32.totalorder %s13, 1
    %p31 = por %p29, %p30
    %p32 = scmp.ne.s32.totalorder %s21, %s22
    %p33 = scmp.eq.s32.totalorder %s13, 0
    %p34 = por %p32, %p33
    %p35 = scmp.ne.s32.totalorder %s21, %s22
    %p36 = scmp.eq.s32.totalorder %s14, 1
    %p37 = por %p35, %p36
    %p39 = scmp.ne.s32.totalorder %s22, %s38
    %p40 = scmp.eq.s32.totalorder %s14, 0
    %p41 = por %p39, %p40
    %s43 = sadd.s32 %s42, 1
    %p46 = scmp.eq.s32.totalorder %s8, 1
    %p47 = scmp.ne.s32.totalorder %s42, %s44
    %p48 = scmp.eq.s32.totalorder %s8, 0
    %p49 = por %p47, %p48
    %p50 = scmp.ne.s32.totalorder %s42, %s44
    %p51 = scmp.eq.s32.totalorder %s13, 1
    %p52 = por %p50, %p51
    %p53 = scmp.ne.s32.totalorder %s44, %s45
    %p54 = scmp.eq.s32.totalorder %s13, 0
    %p55 = por %p53, %p54
    %p56 = scmp.ne.s32.totalorder %s44, %s45
    %p57 = scmp.eq.s32.totalorder %s14, 1
    %p58 = por %p56, %p57
    %p60 = scmp.ne.s32.totalorder %s45, %s59
    %p61 = scmp.eq.s32.totalorder %s14, 0
    %p62 = por %p60, %p61
    %s63 = ssub.s32 %s8, %s15
    %p64 = scmp.eq.s32.totalorder %s63, 0
    %s66 = sadd.s32 %s65, 1
    %s67 = scalar_select %p64, %s65, %s66
    %p70 = pneg %p64
    %p71 = scmp.eq.s32.totalorder %s8, 1
    %p72 = por %p70, %p71
    %p73 = scmp.ne.s32.totalorder %s65, %s68
    %p74 = scmp.eq.s32.totalorder %s8, 0
    %p75 = por %p73, %p74
    %p76 = scmp.ne.s32.totalorder %s65, %s68
    %p77 = scmp.eq.s32.totalorder %s13, 1
    %p78 = por %p76, %p77
    %p79 = scmp.ne.s32.totalorder %s68, %s69
    %p80 = scmp.eq.s32.totalorder %s13, 0
    %p81 = por %p79, %p80
    %p82 = scmp.ne.s32.totalorder %s68, %s69
    %p83 = scmp.eq.s32.totalorder %s14, 1
    %p84 = por %p82, %p83
    %p86 = scmp.ne.s32.totalorder %s69, %s85
    %p87 = scmp.eq.s32.totalorder %s14, 0
    %p88 = por %p86, %p87
    %p89 = scmp.le.s32.totalorder 1, %s8
    %p90 = scmp.lt.s32.totalorder %s8, 3
    %p91 = pnand %p89, %p90
    %p92 = pneg %p91
    // Predicated region
    $region9: #{tcn_forward_pallas.1} parent=5 // pred_check
      _
    $region10: #{tcn_forward_pallas.1} parent=5 // pred_check_branch
      %94 = sbr.rel (%p91) target = $region12
    $region11: #{tcn_forward_pallas.1} parent=5 // pred_region
      %s95 = ssub.s32 %s8, 1
      // Predicated region
      $region13: #{tcn_forward_pallas.1} parent=11 // pred_check
        %p96 = pneg %p55
      $region14: #{tcn_forward_pallas.1} parent=11 // pred_check_branch
        %98 = sbr.rel (%p96) target = $region16
      $region15: #{tcn_forward_pallas.1} parent=11 // pred_region
        _
      $region16: #{tcn_forward_pallas.1} parent=11 // pred_fallthru
        _
    $region12: #{tcn_forward_pallas.1} parent=5 // pred_fallthru
      _
    %p99 = scmp.lt.s32.totalorder %s8, 2
    // Predicated region
    $region17: #{tcn_forward_pallas.1} parent=5 // pred_check
      %p100 = pneg %p99
    $region18: #{tcn_forward_pallas.1} parent=5 // pred_check_branch
      %102 = sbr.rel (%p100) target = $region20
    $region19: #{tcn_forward_pallas.1} parent=5 // pred_region
      // Predicated region
      $region21: #{tcn_forward_pallas.1} parent=19 // pred_check
        %p103 = pneg %p28
      $region22: #{tcn_forward_pallas.1} parent=19 // pred_check_branch
        %105 = sbr.rel (%p103) target = $region24
      $region23: #{tcn_forward_pallas.1} parent=19 // pred_region
        %s106 = smul.u32 4, %s8
        %p107 = scmp.lt.s32.totalorder %s106, 7
        %s108 = scalar_select %p107, %s106, 7
        %s109 = smul.addr %s108, 2
        %s110 = smul.addr %s109, 4
        %s111 = scalar_lea.vmem %s0, %s110
        %s112 = smul.u32 4, %s8
      $region24: #{tcn_forward_pallas.1} parent=19 // pred_fallthru
        _
    $region20: #{tcn_forward_pallas.1} parent=5 // pred_fallthru
      _
    %p113 = scmp.le.s32.totalorder 1, %s8
    %p114 = scmp.lt.s32.totalorder %s8, 3
    %p115 = pnand %p113, %p114
    %p116 = pneg %p115
    // Predicated region
    $region25: #{tcn_forward_pallas.1} parent=5 // pred_check
      _
    $region26: #{tcn_forward_pallas.1} parent=5 // pred_check_branch
      %118 = sbr.rel (%p115) target = $region28
    $region27: #{tcn_forward_pallas.1} parent=5 // pred_region
      %s119 = ssub.s32 %s8, 1
      %s120 = smul.u32 4, %s13
      %p121 = scmp.lt.s32.totalorder %s120, 7
      %s122 = scalar_select %p121, %s120, 7
      %s123 = smul.addr %s122, 2
      %s124 = smul.addr %s123, 4
      %s125 = scalar_lea.vmem %s0, %s124
      %p126 = pneg %p34
      %p127 = pneg %p31
      %p128 = pneg %p55
      %p129 = pneg %p52
      %p130 = pneg %p81
      %p131 = pneg %p78
      %s132 = smul.u32 4, %s13
      %p133 = scmp.lt.s32.totalorder %s132, 7
      %s134 = scalar_select %p133, %s132, 7
      %s135 = smul.addr %s134, 2
      %s136 = smul.addr %s135, 8
      %s137 = scalar_lea.vmem %s2, %s136
      %s138 = smul.u32 4, %s13
      %p139 = scmp.lt.s32.totalorder %s138, 7
      %s140 = scalar_select %p139, %s138, 7
      %s141 = smul.addr %s140, 2
      %s142 = smul.addr %s141, 4
      %s143 = scalar_lea.vmem %s0, %s142
      %s144 = smul.u32 4, %s13
      %s145 = smul.u32 4, %s13
      %p146 = scmp.lt.s32.totalorder %s145, 7
      %s147 = scalar_select %p146, %s145, 7
      %s148 = smul.addr %s147, 2
      %s149 = smul.addr %s148, 8
      %s150 = scalar_lea.vmem %s2, %s149
      %s151 = smul.u32 4, %s13
      %v152 = vld [vmem:[%s143] sm:$0xff]
      %v153 = vld [vmem:[%s143 + $0x8] sm:$0xff]
      %v154 = vld [vmem:[%s143 + $0x10] sm:$0xff]
      %v155 = vld [vmem:[%s143 + $0x18] sm:$0xff]
      %vm156 = vcmask 125952
      %157 = vst.msk [vmem:[#allocation2] sm:$0xf] %vm156, 0.0
      %158 = vst.msk [vmem:[#allocation2 + $0x20] sm:$0xf] %vm156, 0.0
      %159 = vst.msk [vmem:[#allocation2 + $0x40] sm:$0xf] %vm156, 0.0
      %160 = vst.msk [vmem:[#allocation2 + $0x60] sm:$0xf] %vm156, 0.0
      %v165 = vcombine.high %v152, %v152
      %v166 = vcombine.high %v153, %v153
      %v167 = vcombine.high %v154, %v154
      %v168 = vcombine.high %v155, %v155
      %169 = vrot.lane.b32.xlu0 %v152, 16
      %v170 = vpop.permute.xlu0 %169
      %171 = vrot.lane.b32.xlu0 %v165, 16
      %v172 = vpop.permute.xlu0 %171
      %173 = vrot.lane.b32.xlu0 %v153, 16
      %v174 = vpop.permute.xlu0 %173
      %175 = vrot.lane.b32.xlu0 %v166, 16
      %v176 = vpop.permute.xlu0 %175
      %177 = vrot.lane.b32.xlu0 %v154, 16
      %v178 = vpop.permute.xlu0 %177
      %179 = vrot.lane.b32.xlu0 %v167, 16
      %v180 = vpop.permute.xlu0 %179
      %181 = vrot.lane.b32.xlu0 %v155, 16
      %v182 = vpop.permute.xlu0 %181
      %183 = vrot.lane.b32.xlu0 %v168, 16
      %v184 = vpop.permute.xlu0 %183
      %vm185 = vcmask 130048
      %v186 = vsel %vm185, %v170, %v172
      %v187 = vsel %vm185, %v174, %v176
      %v188 = vsel %vm185, %v178, %v180
      %v189 = vsel %vm185, %v182, %v184
      %vm198 = vcmask 1043584
      %199 = vst.msk [vmem:[#allocation2] sm:$0xf] %vm198, %v170
      %200 = vst [vmem:[#allocation2 + $0x8] sm:$0xf] %v186
      %201 = vst.msk [vmem:[#allocation2 + $0x20] sm:$0xf] %vm198, %v174
      %202 = vst [vmem:[#allocation2 + $0x28] sm:$0xf] %v187
      %203 = vst.msk [vmem:[#allocation2 + $0x40] sm:$0xf] %vm198, %v178
      %204 = vst [vmem:[#allocation2 + $0x48] sm:$0xf] %v188
      %205 = vst.msk [vmem:[#allocation2 + $0x60] sm:$0xf] %vm198, %v182
      %206 = vst [vmem:[#allocation2 + $0x68] sm:$0xf] %v189
      %v207 = vcombine.low %v152, %v152
      %v208 = vcombine.low %v153, %v153
      %v209 = vcombine.low %v154, %v154
      %v210 = vcombine.low %v155, %v155
      %215 = vst [vmem:[#allocation2] sm:$0xf0] %v207
      %216 = vst [vmem:[#allocation2 + $0x8] sm:$0xf0] %v152
      %217 = vst [vmem:[#allocation2 + $0x20] sm:$0xf0] %v208
      %218 = vst [vmem:[#allocation2 + $0x28] sm:$0xf0] %v153
      %219 = vst [vmem:[#allocation2 + $0x40] sm:$0xf0] %v209
      %220 = vst [vmem:[#allocation2 + $0x48] sm:$0xf0] %v154
      %221 = vst [vmem:[#allocation2 + $0x60] sm:$0xf0] %v210
      %222 = vst [vmem:[#allocation2 + $0x68] sm:$0xf0] %v155
      %223 = vrot.lane.b32.xlu0 %v152, 112
      %v224 = vpop.permute.xlu0 %223
      %225 = vrot.lane.b32.xlu0 %v165, 112
      %v226 = vpop.permute.xlu0 %225
      %227 = vrot.lane.b32.xlu0 %v153, 112
      %v228 = vpop.permute.xlu0 %227
      %229 = vrot.lane.b32.xlu0 %v166, 112
      %v230 = vpop.permute.xlu0 %229
      %231 = vrot.lane.b32.xlu0 %v154, 112
      %v232 = vpop.permute.xlu0 %231
      %233 = vrot.lane.b32.xlu0 %v167, 112
      %v234 = vpop.permute.xlu0 %233
      %235 = vrot.lane.b32.xlu0 %v155, 112
      %v236 = vpop.permute.xlu0 %235
      %237 = vrot.lane.b32.xlu0 %v168, 112
      %v238 = vpop.permute.xlu0 %237
      %vm239 = vcmask 916480
      %v240 = vsel %vm239, %v224, %v226
      %v241 = vsel %vm239, %v228, %v230
      %v242 = vsel %vm239, %v232, %v234
      %v243 = vsel %vm239, %v236, %v238
      %252 = vst [vmem:[#allocation2 + $0x10] sm:$0xf] %v240
      %vm253 = vcmask 912384
      %254 = vst.msk [vmem:[#allocation2 + $0x18] sm:$0xf] %vm253, %v226
      %255 = vst [vmem:[#allocation2 + $0x30] sm:$0xf] %v241
      %256 = vst.msk [vmem:[#allocation2 + $0x38] sm:$0xf] %vm253, %v230
      %257 = vst [vmem:[#allocation2 + $0x50] sm:$0xf] %v242
      %258 = vst.msk [vmem:[#allocation2 + $0x58] sm:$0xf] %vm253, %v234
      %259 = vst [vmem:[#allocation2 + $0x70] sm:$0xf] %v243
      %260 = vst.msk [vmem:[#allocation2 + $0x78] sm:$0xf] %vm253, %v238
      %vm261 = vcmask 1044352
      %262 = vst.msk [vmem:[#allocation2 + $0x18] sm:$0xf] %vm261, 0.0
      %263 = vst.msk [vmem:[#allocation2 + $0x38] sm:$0xf] %vm261, 0.0
      %264 = vst.msk [vmem:[#allocation2 + $0x58] sm:$0xf] %vm261, 0.0
      %265 = vst.msk [vmem:[#allocation2 + $0x78] sm:$0xf] %vm261, 0.0
      %v266 = vlaneseq
      %vm267 = vcmp.ge.s32.totalorder %v266, 0
      %vm268 = vcmp.lt.s32.totalorder %v266, 256
      %vm269 = vmand %vm267, %vm268
      %s270 = scalar_lea.vmem [#allocation2], 20
      %271 = vst.msk [vmem:[%s270] ss:$8 sm:$0x3] %vm269, 1.0
      %272 = vst.msk [vmem:[%s270] ss:$8 sm:$0x0] %vm269, 1.0
      %s273 = scalar_lea.vmem [#allocation2], 52
      %274 = vst.msk [vmem:[%s273] ss:$8 sm:$0x3] %vm269, 1.0
      %275 = vst.msk [vmem:[%s273] ss:$8 sm:$0x0] %vm269, 1.0
      %s276 = scalar_lea.vmem [#allocation2], 84
      %277 = vst.msk [vmem:[%s276] ss:$8 sm:$0x3] %vm269, 1.0
      %278 = vst.msk [vmem:[%s276] ss:$8 sm:$0x0] %vm269, 1.0
      %s279 = scalar_lea.vmem [#allocation2], 116
      %280 = vst.msk [vmem:[%s279] ss:$8 sm:$0x3] %vm269, 1.0
      %281 = vst.msk [vmem:[%s279] ss:$8 sm:$0x0] %vm269, 1.0
      %v282 = vld [vmem:[%s1] sm:$0xff]
      %v283 = vld [vmem:[%s1 + $0x8] sm:$0xff]
      %v284 = vld [vmem:[%s1 + $0x10] sm:$0xff]
      %v285 = vld [vmem:[%s1 + $0x18] sm:$0xff]
      %v286 = vld [vmem:[%s1 + $0x20] sm:$0xff]
      %v287 = vld [vmem:[%s1 + $0x28] sm:$0xff]
      %v288 = vld [vmem:[%s1 + $0x30] sm:$0xff]
      %v289 = vld [vmem:[%s1 + $0x38] sm:$0xff]
      %v290 = vld [vmem:[%s1 + $0x40] sm:$0xff]
      %v291 = vld [vmem:[%s1 + $0x48] sm:$0xff]
      %v292 = vld [vmem:[%s1 + $0x50] sm:$0xff]
      %v293 = vld [vmem:[%s1 + $0x58] sm:$0xff]
      %v294 = vld [vmem:[#allocation2] sm:$0xff]
      %v295 = vld [vmem:[#allocation2 + $0x8] sm:$0xff]
      %v296 = vld [vmem:[#allocation2 + $0x10] sm:$0x1f]
      %v297 = vld [vmem:[#allocation2 + $0x18] sm:$0x1f]
      %v298 = vld [vmem:[#allocation2 + $0x20] sm:$0xff]
      %v299 = vld [vmem:[#allocation2 + $0x28] sm:$0xff]
      %v300 = vld [vmem:[#allocation2 + $0x30] sm:$0x1f]
      %v301 = vld [vmem:[#allocation2 + $0x38] sm:$0x1f]
      %v302 = vld [vmem:[#allocation2 + $0x40] sm:$0xff]
      %v303 = vld [vmem:[#allocation2 + $0x48] sm:$0xff]
      %v304 = vld [vmem:[#allocation2 + $0x50] sm:$0x1f]
      %v305 = vld [vmem:[#allocation2 + $0x58] sm:$0x1f]
      %v306 = vld [vmem:[#allocation2 + $0x60] sm:$0xff]
      %v307 = vld [vmem:[#allocation2 + $0x68] sm:$0xff]
      %v308 = vld [vmem:[#allocation2 + $0x70] sm:$0x1f]
      %v309 = vld [vmem:[#allocation2 + $0x78] sm:$0x1f]
      %vm310 = vcmask 105472
      %v312 = vsel %vm310, %v282, 0
      %v315 = vsel %vm310, %v283, 0
      %v318 = vsel %vm310, %v284, 0
      %vm320 = vcmask 1044480
      %v322 = vsel %vm320, %v296, 0
      %v325 = vsel %vm320, %v297, 0
      %327 = vmatprep.subr.mxu0 %v295
      %328 = vmatpush1.msra.mxu0 %v294
      %329 = vmatprep.subr.mxu0 %v325
      %330 = vmatpush1.msra.mxu0 %v322
      %331 = vmatprep.subr.mxu0 0.0
      %332 = vmatpush1.msra.mxu0 0.0
      %333 = vmatprep.subr.mxu0 0.0
      %334 = vmatpush1.msra.mxu0 0.0
      %335 = vmatprep.subr.mxu0 0.0
      %336 = vmatpush1.msra.mxu0 0.0
      %337 = vmatprep.subr.mxu0 0.0
      %338 = vmatpush1.msra.mxu0 0.0
      %339 = vmatprep.subr.mxu0 0.0
      %340 = vmatpush1.msra.mxu0 0.0
      %341 = vmatprep.subr.mxu0 0.0
      %342 = vmatpush1.msra.mxu0 0.0
      %343 = vmatprep.subr.mxu0 0.0
      %344 = vmatpush1.msra.mxu0 0.0
      %345 = vmatprep.subr.mxu0 0.0
      %346 = vmatpush1.msra.mxu0 0.0
      %347 = vmatprep.subr.mxu0 0.0
      %348 = vmatpush1.msra.mxu0 0.0
      %349 = vmatprep.subr.mxu0 0.0
      %350 = vmatpush1.msra.mxu0 0.0
      %351 = vmatprep.subr.mxu0 0.0
      %352 = vmatpush1.msra.mxu0 0.0
      %353 = vmatprep.subr.mxu0 0.0
      %354 = vmatpush1.msra.mxu0 0.0
      %355 = vmatprep.subr.mxu0 0.0
      %356 = vmatpush1.msra.mxu0 0.0
      %357 = vmatprep.subr.mxu0 0.0
      %358 = vmatpush1.msra.mxu0 0.0
      %359 = vmatprep.subr.mxu0 0.0
      %360 = vmatpush1.msra.mxu0 0.0
      %361 = vmatprep.subr.mxu0 0.0
      %362 = vmatpush1.msra.mxu0 0.0
      %363 = vmatprep.subr.mxu0 0.0
      %364 = vmatpush1.msra.mxu0 0.0
      %365 = vmatprep.subr.mxu0 0.0
      %366 = vmatpush1.msra.mxu0 0.0
      %367 = vmatprep.subr.mxu0 0.0
      %368 = vmatpush1.msra.mxu0 0.0
      %369 = vmatprep.subr.mxu0 0.0
      %370 = vmatpush1.msra.mxu0 0.0
      %371 = vmatprep.subr.mxu0 0.0
      %372 = vmatpush1.msra.mxu0 0.0
      %373 = vmatprep.subr.mxu0 0.0
      %374 = vmatpush1.msra.mxu0 0.0
      %375 = vmatprep.subr.mxu0 0.0
      %376 = vmatpush1.msra.mxu0 0.0
      %377 = vmatprep.subr.mxu0 0.0
      %378 = vmatpush1.msra.mxu0 0.0
      %379 = vmatprep.subr.mxu0 0.0
      %380 = vmatpush1.msra.mxu0 0.0
      %381 = vmatprep.subr.mxu0 0.0
      %382 = vmatpush1.msra.mxu0 0.0
      %383 = vmatprep.subr.mxu0 0.0
      %384 = vmatpush1.msra.mxu0 0.0
      %385 = vmatprep.subr.mxu0 0.0
      %386 = vmatpush1.msra.mxu0 0.0
      %387 = vmatprep.subr.mxu0 0.0
      %388 = vmatpush1.msra.mxu0 0.0
      %389 = vmatprep.subr.mxu0 0.0
      %390 = vmatpush1.msra.mxu0 0.0
      %391 = vmatprep.mubr.f32.mxu0 0.0
      %392 = vmatmul.mubr.f32.gmra.mrb[0].mxu0 %v312
      %v393 = vpop.f32.mrb[0].mxu0
      %v394 = vadd.f32 0.0, %v393
      %v395 = vpop.f32.mrb[0].mxu0
      %v396 = vadd.f32 0.0, %v395
      %397 = vmatprep.mubr.f32.mxu0 0.0
      %398 = vmatmul.mubr.f32.gmra.mrb[0].mxu0 %v315
      %v399 = vpop.f32.mrb[0].mxu0
      %v400 = vadd.f32 0.0, %v399
      %v401 = vpop.f32.mrb[0].mxu0
      %v402 = vadd.f32 0.0, %v401
      %403 = vmatprep.mubr.f32.mxu0 0.0
      %404 = vmatmul.mubr.f32.gmra.mrb[0].mxu0 %v318
      %v405 = vpop.f32.mrb[0].mxu0
      %v406 = vadd.f32 0.0, %v405
      %v407 = vpop.f32.mrb[0].mxu0
      %v408 = vadd.f32 0.0, %v407
      %409 = vdwg.mxu0
      %v411 = vsel %vm310, %v285, 0
      %v414 = vsel %vm310, %v286, 0
      %v417 = vsel %vm310, %v287, 0
      %v420 = vsel %vm320, %v300, 0
      %v423 = vsel %vm320, %v301, 0
      %425 = vmatprep.subr.mxu0 %v299
      %426 = vmatpush1.msra.mxu0 %v298
      %427 = vmatprep.subr.mxu0 %v423
      %428 = vmatpush1.msra.mxu0 %v420
      %429 = vmatprep.subr.mxu0 0.0
      %430 = vmatpush1.msra.mxu0 0.0
      %431 = vmatprep.subr.mxu0 0.0
      %432 = vmatpush1.msra.mxu0 0.0
      %433 = vmatprep.subr.mxu0 0.0
      %434 = vmatpush1.msra.mxu0 0.0
      %435 = vmatprep.subr.mxu0 0.0
      %436 = vmatpush1.msra.mxu0 0.0
      %437 = vmatprep.subr.mxu0 0.0
      %438 = vmatpush1.msra.mxu0 0.0
      %439 = vmatprep.subr.mxu0 0.0
      %440 = vmatpush1.msra.mxu0 0.0
      %441 = vmatprep.subr.mxu0 0.0
      %442 = vmatpush1.msra.mxu0 0.0
      %443 = vmatprep.subr.mxu0 0.0
      %444 = vmatpush1.msra.mxu0 0.0
      %445 = vmatprep.subr.mxu0 0.0
      %446 = vmatpush1.msra.mxu0 0.0
      %447 = vmatprep.subr.mxu0 0.0
      %448 = vmatpush1.msra.mxu0 0.0
      %449 = vmatprep.subr.mxu0 0.0
      %450 = vmatpush1.msra.mxu0 0.0
      %451 = vmatprep.subr.mxu0 0.0
      %452 = vmatpush1.msra.mxu0 0.0
      %453 = vmatprep.subr.mxu0 0.0
      %454 = vmatpush1.msra.mxu0 0.0
      %455 = vmatprep.subr.mxu0 0.0
      %456 = vmatpush1.msra.mxu0 0.0
      %457 = vmatprep.subr.mxu0 0.0
      %458 = vmatpush1.msra.mxu0 0.0
      %459 = vmatprep.subr.mxu0 0.0
      %460 = vmatpush1.msra.mxu0 0.0
      %461 = vmatprep.subr.mxu0 0.0
      %462 = vmatpush1.msra.mxu0 0.0
      %463 = vmatprep.subr.mxu0 0.0
      %464 = vmatpush1.msra.mxu0 0.0
      %465 = vmatprep.subr.mxu0 0.0
      %466 = vmatpush1.msra.mxu0 0.0
      %467 = vmatprep.subr.mxu0 0.0
      %468 = vmatpush1.msra.mxu0 0.0
      %469 = vmatprep.subr.mxu0 0.0
      %470 = vmatpush1.msra.mxu0 0.0
      %471 = vmatprep.subr.mxu0 0.0
      %472 = vmatpush1.msra.mxu0 0.0
      %473 = vmatprep.subr.mxu0 0.0
      %474 = vmatpush1.msra.mxu0 0.0
      %475 = vmatprep.subr.mxu0 0.0
      %476 = vmatpush1.msra.mxu0 0.0
      %477 = vmatprep.subr.mxu0 0.0
      %478 = vmatpush1.msra.mxu0 0.0
      %479 = vmatprep.subr.mxu0 0.0
      %480 = vmatpush1.msra.mxu0 0.0
      %481 = vmatprep.subr.mxu0 0.0
      %482 = vmatpush1.msra.mxu0 0.0
      %483 = vmatprep.subr.mxu0 0.0
      %484 = vmatpush1.msra.mxu0 0.0
      %485 = vmatprep.subr.mxu0 0.0
      %486 = vmatpush1.msra.mxu0 0.0
      %487 = vmatprep.subr.mxu0 0.0
      %488 = vmatpush1.msra.mxu0 0.0
      %489 = vmatprep.mubr.f32.mxu0 0.0
      %490 = vmatmul.mubr.f32.gmra.mrb[0].mxu0 %v411
      %v491 = vpop.f32.mrb[0].mxu0
      %v492 = vadd.f32 0.0, %v491
      %v493 = vpop.f32.mrb[0].mxu0
      %v494 = vadd.f32 0.0, %v493
      %495 = vmatprep.mubr.f32.mxu0 0.0
      %496 = vmatmul.mubr.f32.gmra.mrb[0].mxu0 %v414
      %v497 = vpop.f32.mrb[0].mxu0
      %v498 = vadd.f32 0.0, %v497
      %v499 = vpop.f32.mrb[0].mxu0
      %v500 = vadd.f32 0.0, %v499
      %501 = vmatprep.mubr.f32.mxu0 0.0
      %502 = vmatmul.mubr.f32.gmra.mrb[0].mxu0 %v417
      %v503 = vpop.f32.mrb[0].mxu0
      %v504 = vadd.f32 0.0, %v503
      %v505 = vpop.f32.mrb[0].mxu0
      %v506 = vadd.f32 0.0, %v505
      %507 = vdwg.mxu0
      %v509 = vsel %vm310, %v288, 0
      %v512 = vsel %vm310, %v289, 0
      %v515 = vsel %vm310, %v290, 0
      %v518 = vsel %vm320, %v304, 0
      %v521 = vsel %vm320, %v305, 0
      %523 = vmatprep.subr.mxu0 %v303
      %524 = vmatpush1.msra.mxu0 %v302
      %525 = vmatprep.subr.mxu0 %v521
      %526 = vmatpush1.msra.mxu0 %v518
      %527 = vmatprep.subr.mxu0 0.0
      %528 = vmatpush1.msra.mxu0 0.0
      %529 = vmatprep.subr.mxu0 0.0
      %530 = vmatpush1.msra.mxu0 0.0
      %531 = vmatprep.subr.mxu0 0.0
      %532 = vmatpush1.msra.mxu0 0.0
      %533 = vmatprep.subr.mxu0 0.0
      %534 = vmatpush1.msra.mxu0 0.0
      %535 = vmatprep.subr.mxu0 0.0
      %536 = vmatpush1.msra.mxu0 0.0
      %537 = vmatprep.subr.mxu0 0.0
      %538 = vmatpush1.msra.mxu0 0.0
      %539 = vmatprep.subr.mxu0 0.0
      %540 = vmatpush1.msra.mxu0 0.0
      %541 = vmatprep.subr.mxu0 0.0
      %542 = vmatpush1.msra.mxu0 0.0
      %543 = vmatprep.subr.mxu0 0.0
      %544 = vmatpush1.msra.mxu0 0.0
      %545 = vmatprep.subr.mxu0 0.0
      %546 = vmatpush1.msra.mxu0 0.0
      %547 = vmatprep.subr.mxu0 0.0
      %548 = vmatpush1.msra.mxu0 0.0
      %549 = vmatprep.subr.mxu0 0.0
      %550 = vmatpush1.msra.mxu0 0.0
      %551 = vmatprep.subr.mxu0 0.0
      %552 = vmatpush1.msra.mxu0 0.0
      %553 = vmatprep.subr.mxu0 0.0
      %554 = vmatpush1.msra.mxu0 0.0
      %555 = vmatprep.subr.mxu0 0.0
      %556 = vmatpush1.msra.mxu0 0.0
      %557 = vmatprep.subr.mxu0 0.0
      %558 = vmatpush1.msra.mxu0 0.0
      %559 = vmatprep.subr.mxu0 0.0
      %560 = vmatpush1.msra.mxu0 0.0
      %561 = vmatprep.subr.mxu0 0.0
      %562 = vmatpush1.msra.mxu0 0.0
      %563 = vmatprep.subr.mxu0 0.0
      %564 = vmatpush1.msra.mxu0 0.0
      %565 = vmatprep.subr.mxu0 0.0
      %566 = vmatpush1.msra.mxu0 0.0
      %567 = vmatprep.subr.mxu0 0.0
      %568 = vmatpush1.msra.mxu0 0.0
      %569 = vmatprep.subr.mxu0 0.0
      %570 = vmatpush1.msra.mxu0 0.0
      %571 = vmatprep.subr.mxu0 0.0
      %572 = vmatpush1.msra.mxu0 0.0
      %573 = vmatprep.subr.mxu0 0.0
      %574 = vmatpush1.msra.mxu0 0.0
      %575 = vmatprep.subr.mxu0 0.0
      %576 = vmatpush1.msra.mxu0 0.0
      %577 = vmatprep.subr.mxu0 0.0
      %578 = vmatpush1.msra.mxu0 0.0
      %579 = vmatprep.subr.mxu0 0.0
      %580 = vmatpush1.msra.mxu0 0.0
      %581 = vmatprep.subr.mxu0 0.0
      %582 = vmatpush1.msra.mxu0 0.0
      %583 = vmatprep.subr.mxu0 0.0
      %584 = vmatpush1.msra.mxu0 0.0
      %585 = vmatprep.subr.mxu0 0.0
      %586 = vmatpush1.msra.mxu0 0.0
      %587 = vmatprep.mubr.f32.mxu0 0.0
      %588 = vmatmul.mubr.f32.gmra.mrb[0].mxu0 %v509
      %v589 = vpop.f32.mrb[0].mxu0
      %v590 = vadd.f32 0.0, %v589
      %v591 = vpop.f32.mrb[0].mxu0
      %v592 = vadd.f32 0.0, %v591
      %593 = vmatprep.mubr.f32.mxu0 0.0
      %594 = vmatmul.mubr.f32.gmra.mrb[0].mxu0 %v512
      %v595 = vpop.f32.mrb[0].mxu0
      %v596 = vadd.f32 0.0, %v595
      %v597 = vpop.f32.mrb[0].mxu0
      %v598 = vadd.f32 0.0, %v597
      %599 = vmatprep.mubr.f32.mxu0 0.0
      %600 = vmatmul.mubr.f32.gmra.mrb[0].mxu0 %v515
      %v601 = vpop.f32.mrb[0].mxu0
      %v602 = vadd.f32 0.0, %v601
      %v603 = vpop.f32.mrb[0].mxu0
      %v604 = vadd.f32 0.0, %v603
      %605 = vdwg.mxu0
      %v607 = vsel %vm310, %v291, 0
      %v610 = vsel %vm310, %v292, 0
      %v613 = vsel %vm310, %v293, 0
      %v616 = vsel %vm320, %v308, 0
      %v619 = vsel %vm320, %v309, 0
      %621 = vmatprep.subr.mxu0 %v307
      %622 = vmatpush1.msra.mxu0 %v306
      %623 = vmatprep.subr.mxu0 %v619
      %624 = vmatpush1.msra.mxu0 %v616
      %625 = vmatprep.subr.mxu0 0.0
      %626 = vmatpush1.msra.mxu0 0.0
      %627 = vmatprep.subr.mxu0 0.0
      %628 = vmatpush1.msra.mxu0 0.0
      %629 = vmatprep.subr.mxu0 0.0
      %630 = vmatpush1.msra.mxu0 0.0
      %631 = vmatprep.subr.mxu0 0.0
      %632 = vmatpush1.msra.mxu0 0.0
      %633 = vmatprep.subr.mxu0 0.0
      %634 = vmatpush1.msra.mxu0 0.0
      %635 = vmatprep.subr.mxu0 0.0
      %636 = vmatpush1.msra.mxu0 0.0
      %637 = vmatprep.subr.mxu0 0.0
      %638 = vmatpush1.msra.mxu0 0.0
      %639 = vmatprep.subr.mxu0 0.0
      %640 = vmatpush1.msra.mxu0 0.0
      %641 = vmatprep.subr.mxu0 0.0
      %642 = vmatpush1.msra.mxu0 0.0
      %643 = vmatprep.subr.mxu0 0.0
      %644 = vmatpush1.msra.mxu0 0.0
      %645 = vmatprep.subr.mxu0 0.0
      %646 = vmatpush1.msra.mxu0 0.0
      %647 = vmatprep.subr.mxu0 0.0
      %648 = vmatpush1.msra.mxu0 0.0
      %649 = vmatprep.subr.mxu0 0.0
      %650 = vmatpush1.msra.mxu0 0.0
      %651 = vmatprep.subr.mxu0 0.0
      %652 = vmatpush1.msra.mxu0 0.0
      %653 = vmatprep.subr.mxu0 0.0
      %654 = vmatpush1.msra.mxu0 0.0
      %655 = vmatprep.subr.mxu0 0.0
      %656 = vmatpush1.msra.mxu0 0.0
      %657 = vmatprep.subr.mxu0 0.0
      %658 = vmatpush1.msra.mxu0 0.0
      %659 = vmatprep.subr.mxu0 0.0
      %660 = vmatpush1.msra.mxu0 0.0
      %661 = vmatprep.subr.mxu0 0.0
      %662 = vmatpush1.msra.mxu0 0.0
      %663 = vmatprep.subr.mxu0 0.0
      %664 = vmatpush1.msra.mxu0 0.0
      %665 = vmatprep.subr.mxu0 0.0
      %666 = vmatpush1.msra.mxu0 0.0
      %667 = vmatprep.subr.mxu0 0.0
      %668 = vmatpush1.msra.mxu0 0.0
      %669 = vmatprep.subr.mxu0 0.0
      %670 = vmatpush1.msra.mxu0 0.0
      %671 = vmatprep.subr.mxu0 0.0
      %672 = vmatpush1.msra.mxu0 0.0
      %673 = vmatprep.subr.mxu0 0.0
      %674 = vmatpush1.msra.mxu0 0.0
      %675 = vmatprep.subr.mxu0 0.0
      %676 = vmatpush1.msra.mxu0 0.0
      %677 = vmatprep.subr.mxu0 0.0
      %678 = vmatpush1.msra.mxu0 0.0
      %679 = vmatprep.subr.mxu0 0.0
      %680 = vmatpush1.msra.mxu0 0.0
      %681 = vmatprep.subr.mxu0 0.0
      %682 = vmatpush1.msra.mxu0 0.0
      %683 = vmatprep.subr.mxu0 0.0
      %684 = vmatpush1.msra.mxu0 0.0
      %685 = vmatprep.mubr.f32.mxu0 0.0
      %686 = vmatmul.mubr.f32.gmra.mrb[0].mxu0 %v607
      %v687 = vpop.f32.mrb[0].mxu0
      %v688 = vadd.f32 0.0, %v687
      %v689 = vpop.f32.mrb[0].mxu0
      %v690 = vadd.f32 0.0, %v689
      %691 = vmatprep.mubr.f32.mxu0 0.0
      %692 = vmatmul.mubr.f32.gmra.mrb[0].mxu0 %v610
      %v693 = vpop.f32.mrb[0].mxu0
      %v694 = vadd.f32 0.0, %v693
      %v695 = vpop.f32.mrb[0].mxu0
      %v696 = vadd.f32 0.0, %v695
      %697 = vmatprep.mubr.f32.mxu0 0.0
      %698 = vmatmul.mubr.f32.gmra.mrb[0].mxu0 %v613
      %v699 = vpop.f32.mrb[0].mxu0
      %v700 = vadd.f32 0.0, %v699
      %v701 = vpop.f32.mrb[0].mxu0
      %v702 = vadd.f32 0.0, %v701
      %703 = vdwg.mxu0
      %v704 = vadd.f32 %v394, %v406
      %v705 = vadd.f32 %v396, %v408
      %v706 = vadd.f32 %v492, %v504
      %v707 = vadd.f32 %v494, %v506
      %v708 = vadd.f32 %v590, %v602
      %v709 = vadd.f32 %v592, %v604
      %v710 = vadd.f32 %v688, %v700
      %v711 = vadd.f32 %v690, %v702
      %v712 = vxor.u32 %v400, 2147483648
      %v713 = vxor.u32 %v402, 2147483648
      %v714 = vxor.u32 %v498, 2147483648
      %v715 = vxor.u32 %v500, 2147483648
      %v716 = vxor.u32 %v596, 2147483648
      %v717 = vxor.u32 %v598, 2147483648
      %v718 = vxor.u32 %v694, 2147483648
      %v719 = vxor.u32 %v696, 2147483648
      %v720 = vmul.f32 %v712, 1.442695
      %v721 = vpow.pop %v720
      %v722 = vmul.f32 %v713, 1.442695
      %v723 = vpow.pop %v722
      %v724 = vmul.f32 %v714, 1.442695
      %v725 = vpow.pop %v724
      %v726 = vmul.f32 %v715, 1.442695
      %v727 = vpow.pop %v726
      %v728 = vmul.f32 %v716, 1.442695
      %v729 = vpow.pop %v728
      %v730 = vmul.f32 %v717, 1.442695
      %v731 = vpow.pop %v730
      %v732 = vmul.f32 %v718, 1.442695
      %v733 = vpow.pop %v732
      %v734 = vmul.f32 %v719, 1.442695
      %v735 = vpow.pop %v734
      %v736 = vadd.f32 %v721, 1.0
      %v737 = vadd.f32 %v723, 1.0
      %v738 = vadd.f32 %v725, 1.0
      %v739 = vadd.f32 %v727, 1.0
      %v740 = vadd.f32 %v729, 1.0
      %v741 = vadd.f32 %v731, 1.0
      %v742 = vadd.f32 %v733, 1.0
      %v743 = vadd.f32 %v735, 1.0
      %v744 = vrcp.pop %v736
      %v745 = vmul.f32 1.0, %v744
      %v746 = vrcp.pop %v737
      %v747 = vmul.f32 1.0, %v746
      %v748 = vrcp.pop %v738
      %v749 = vmul.f32 1.0, %v748
      %v750 = vrcp.pop %v739
      %v751 = vmul.f32 1.0, %v750
      %v752 = vrcp.pop %v740
      %v753 = vmul.f32 1.0, %v752
      %v754 = vrcp.pop %v741
      %v755 = vmul.f32 1.0, %v754
      %v756 = vrcp.pop %v742
      %v757 = vmul.f32 1.0, %v756
      %v758 = vrcp.pop %v743
      %v759 = vmul.f32 1.0, %v758
      %v760 = vmul.f32 %v704, %v745
      %v761 = vmul.f32 %v705, %v747
      %v762 = vmul.f32 %v706, %v749
      %v763 = vmul.f32 %v707, %v751
      %v764 = vmul.f32 %v708, %v753
      %v765 = vmul.f32 %v709, %v755
      %v766 = vmul.f32 %v710, %v757
      %v767 = vmul.f32 %v711, %v759
      %768 = vst [vmem:[%s150] sm:$0xff] %v760
      %769 = vst [vmem:[%s150 + $0x8] sm:$0xff] %v761
      %770 = vst [vmem:[%s150 + $0x10] sm:$0xff] %v762
      %771 = vst [vmem:[%s150 + $0x18] sm:$0xff] %v763
      %772 = vst [vmem:[%s150 + $0x20] sm:$0xff] %v764
      %773 = vst [vmem:[%s150 + $0x28] sm:$0xff] %v765
      %774 = vst [vmem:[%s150 + $0x30] sm:$0xff] %v766
      %775 = vst [vmem:[%s150 + $0x38] sm:$0xff] %v767
      %s776 = smul.u32 4, %s13
      %p777 = scmp.lt.s32.totalorder %s776, 7
      %s778 = scalar_select %p777, %s776, 7
      %s779 = smul.addr %s778, 2
      %s780 = smul.addr %s779, 8
      %s781 = scalar_lea.vmem %s2, %s780
      // Predicated region
      $region29: #{tcn_forward_pallas.1} parent=27 // pred_check
        %p782 = pneg %p78
      $region30: #{tcn_forward_pallas.1} parent=27 // pred_check_branch
        %784 = sbr.rel (%p782) target = $region32
      $region31: #{tcn_forward_pallas.1} parent=27 // pred_region
        %s785 = smul.u32 4, %s13
      $region32: #{tcn_forward_pallas.1} parent=27 // pred_fallthru
        _
    $region28: #{tcn_forward_pallas.1} parent=5 // pred_fallthru
      _
    %p786 = scmp.le.s32.totalorder 2, %s8
    // Predicated region
    $region33: #{tcn_forward_pallas.1} parent=5 // pred_check
      %p787 = pneg %p786
    $region34: #{tcn_forward_pallas.1} parent=5 // pred_check_branch
      %789 = sbr.rel (%p787) target = $region36
    $region35: #{tcn_forward_pallas.1} parent=5 // pred_region
      %s790 = ssub.s32 %s8, 2
      // Predicated region
      $region37: #{tcn_forward_pallas.1} parent=35 // pred_check
        %p791 = pneg %p84
      $region38: #{tcn_forward_pallas.1} parent=35 // pred_check_branch
        %793 = sbr.rel (%p791) target = $region40
      $region39: #{tcn_forward_pallas.1} parent=35 // pred_region
        %s794 = smul.u32 4, %s14
        %p795 = scmp.lt.s32.totalorder %s794, 7
        %s796 = scalar_select %p795, %s794, 7
        %s797 = smul.addr %s796, 2
        %s798 = smul.addr %s797, 8
        %s799 = scalar_lea.vmem %s2, %s798
      $region40: #{tcn_forward_pallas.1} parent=35 // pred_fallthru
        _
    $region36: #{tcn_forward_pallas.1} parent=5 // pred_fallthru
      _
  $region6: #{tcn_forward_pallas.1} parent=0 // loop_footer
    %s12 = sadd.s32 1, %s8
  $region7: #{tcn_forward_pallas.1} parent=0 // loop_footer_branch
    %7 = sbr.rel target = $region3
  $region8: #{tcn_forward_pallas.1} parent=0 // loop_exit
    _

</llo_original>
